<compile_context>
chip_gen: v6e
topology: v6e:2x2x1
jax: 0.10.0
libtpu: 0.0.40
codegen_flags: <defaults>
</compile_context>

<pallas_src>
import math

import jax
import jax.numpy as jnp
from jax.experimental import pallas as pl
from jax.experimental.pallas import tpu as pltpu


def _round_up(x, m):
    return ((x + m - 1) // m) * m


def prefix_mean_kernel(l_ref, inv_ref, x_ref, o_ref, carry_ref):
    """Process one (tb, tq, h) block: blocked cumsum along tq with f32 carry."""
    tb, tq, _ = x_ref.shape

    # First sequence tile of a batch block -> reset the running prefix carry.
    @pl.when(pl.program_id(1) == 0)
    def _():
        carry_ref[...] = jnp.zeros_like(carry_ref)

    lower = l_ref[...]    # (tq, tq) lower-triangular 0/1, in x.dtype
    inv = inv_ref[...]    # (tq, 1) f32, exact 1/(global_row + 1)

    def body(b, carry):
        # Within-tile prefix sums via one MXU triangular matmul, f32 accum.
        sums = jnp.dot(lower, x_ref[b], preferred_element_type=jnp.float32)
        sums = sums + carry_ref[b]            # add total of earlier tiles
        carry_ref[b] = sums[tq - 1:tq, :]     # running total for next tile
        o_ref[b] = (sums * inv).astype(o_ref.dtype)
        return carry

    jax.lax.fori_loop(0, tb, body, 0, unroll=(tb <= 8))


def prefix_mean(x, *, target_block_bytes=2 * 1024 * 1024):
    """Pallas implementation of PrefixMean.forward for x of shape (..., n, 256)."""
    orig_shape = x.shape
    n, h = orig_shape[-2], orig_shape[-1]
    b = math.prod(orig_shape[:-2]) if len(orig_shape) > 2 else 1
    x3 = x.reshape(b, n, h)

    # ---- tiling -----------------------------------------------------------
    # Sequence tile: 256 matches the v6e/v7x MXU; shorter sequences use the
    # full (8-aligned) length so small problems stay a single tile.
    tq = 256 if n >= 256 else _round_up(n, 8)
    n_pad = _round_up(n, tq)

    # Batch slabs per grid step so each DMA block is ~target_block_bytes.
    slab_bytes = tq * h * x.dtype.itemsize
    tb = int(max(1, min(b, target_block_bytes // slab_bytes)))
    b_pad = _round_up(b, tb)

    if (b_pad, n_pad) != (b, n):
        # Zero-pad: padded rows/slabs never influence the real outputs.
        x3 = jnp.pad(x3, ((0, b_pad - b), (0, n_pad - n), (0, 0)))

    # ---- constants hoisted out of the kernel ------------------------------
    lmat = jnp.tril(jnp.ones((tq, tq), dtype=x.dtype))          # 0/1 exact in bf16
    inv_lens = (1.0 / jnp.arange(1, n_pad + 1, dtype=jnp.float32)).reshape(n_pad, 1)

    grid = (b_pad // tb, n_pad // tq)

    out = pl.pallas_call(
        prefix_mean_kernel,
        out_shape=jax.ShapeDtypeStruct((b_pad, n_pad, h), x.dtype),
        grid_spec=pltpu.PrefetchScalarGridSpec(
            num_scalar_prefetch=0,
            grid=grid,
            in_specs=[
                pl.BlockSpec((tq, tq), lambda bi, si: (0, 0)),      # L: VMEM-resident
                pl.BlockSpec((tq, 1), lambda bi, si: (si, 0)),      # 1/(i+1) column
                pl.BlockSpec((tb, tq, h), lambda bi, si: (bi, si, 0)),
            ],
            out_specs=pl.BlockSpec((tb, tq, h), lambda bi, si: (bi, si, 0)),
            scratch_shapes=[pltpu.VMEM((tb, 1, h), jnp.float32)],   # prefix carry
        ),
        compiler_params=pltpu.CompilerParams(
            dimension_semantics=("parallel", "arbitrary"),
            vmem_limit_bytes=32 * 1024 * 1024,
        ),
    )(lmat, inv_lens, x3)

    if (b_pad, n_pad) != (b, n):
        out = out[:b, :n]
    return out.reshape(orig_shape)


if __name__ == "__main__":
    def reference(x):
        n = x.shape[-2]
        lens = jnp.arange(1, n + 1, dtype=jnp.float32).reshape(
            (1,) * (x.ndim - 2) + (n, 1))
        return jnp.cumsum(x, axis=-2) / lens

    # Small shape consistent with the module signature (..., n, 256).
    key = jax.random.PRNGKey(0)
    B, N, H = 2, 8, 256
    x = jax.random.normal(key, (B, N, H), dtype=jnp.float32)
    y = jax.block_until_ready(prefix_mean(x))
    assert y.shape == x.shape and y.dtype == x.dtype
    assert jnp.allclose(y, reference(x), atol=1e-5, rtol=1e-5), "mismatch (small)"

    # Exercise the seq-tiled carry path + padding (n=300 -> two 256 tiles after
    # padding) and extra leading batch dims.
    x2 = jax.random.normal(jax.random.PRNGKey(1), (2, 3, 300, H), dtype=jnp.float32)
    y2 = jax.block_until_ready(prefix_mean(x2))
    assert y2.shape == x2.shape and y2.dtype == x2.dtype
    assert jnp.allclose(y2, reference(x2), atol=1e-5, rtol=1e-4), "mismatch (tiled)"

    print("KERNEL_OK")
</pallas_src>

<mosaic_0001>
module attributes {stable_mosaic.version = 11 : i64} {
  func.func @prefix_mean_kernel(%arg0: i32, %arg1: i32, %arg2: memref<8x8xf32, #tpu.memory_space<vmem>>, %arg3: memref<8x1xf32, #tpu.memory_space<vmem>>, %arg4: memref<2x8x256xf32, #tpu.memory_space<vmem>>, %arg5: memref<2x8x256xf32, #tpu.memory_space<vmem>>, %arg6: memref<2x1x256xf32, #tpu.memory_space<vmem>>) attributes {dimension_semantics = [#tpu.dimension_semantics<parallel>, #tpu.dimension_semantics<arbitrary>], iteration_bounds = array<i64: 1, 1>, scalar_prefetch = 0 : i64, scratch_operands = 1 : i64, tpu.core_type = #tpu.core_type<tc>, window_params = [{pipeline_mode = #tpu.pipeline_mode<synchronous>, transform_indices = @transform_0, window_bounds = array<i64: 8, 8>}, {transform_indices = @transform_1, window_bounds = array<i64: 8, 1>}, {transform_indices = @transform_2, window_bounds = array<i64: 2, 8, 256>}, {transform_indices = @transform_3, window_bounds = array<i64: 2, 8, 256>}]} {
    %c0_i32 = arith.constant 0 : i32
    %0 = arith.cmpi eq, %arg1, %c0_i32 : i32
    %1 = arith.extui %0 : i1 to i32
    %c0_i32_0 = arith.constant 0 : i32
    %2 = arith.cmpi ne, %1, %c0_i32_0 : i32
    scf.if %2 {
      %cst_22 = arith.constant 0.000000e+00 : f32
      %45 = vector.broadcast %cst_22 : f32 to vector<2x1x256xf32>
      %c0_23 = arith.constant 0 : index
      %c0_24 = arith.constant 0 : index
      %c0_25 = arith.constant 0 : index
      %46 = vector.load %arg6[%c0_23, %c0_24, %c0_25] : memref<2x1x256xf32, #tpu.memory_space<vmem>>, vector<2x1x256xf32>
      tpu.vector_store %arg6[%c0_23, %c0_24, %c0_25], %45 {strides = array<i32>} : memref<2x1x256xf32, #tpu.memory_space<vmem>>, vector<2x1x256xf32>,
    } else {
    }
    %c0 = arith.constant 0 : index
    %c0_1 = arith.constant 0 : index
    %3 = vector.load %arg2[%c0, %c0_1] : memref<8x8xf32, #tpu.memory_space<vmem>>, vector<8x8xf32>
    %c0_2 = arith.constant 0 : index
    %c0_3 = arith.constant 0 : index
    %4 = vector.load %arg3[%c0_2, %c0_3] : memref<8x1xf32, #tpu.memory_space<vmem>>, vector<8x1xf32>
    %c0_i32_4 = arith.constant 0 : i32
    %5 = arith.index_cast %c0_i32_4 : i32 to index
    %c0_5 = arith.constant 0 : index
    %c0_6 = arith.constant 0 : index
    %6 = vector.load %arg4[%5, %c0_5, %c0_6] : memref<2x8x256xf32, #tpu.memory_space<vmem>>, vector<1x8x256xf32>
    %7 = vector.shape_cast %6 : vector<1x8x256xf32> to vector<8x256xf32>
    %cst = arith.constant dense<0.000000e+00> : vector<8x256xf32>
    %8 = tpu.matmul %3, %7, %cst {dimension_numbers = #tpu.dot_dimension_numbers<[1], [0], [0], [1], [0, 0, 1, 1], [], []>} : vector<8x8xf32>, vector<8x256xf32>, vector<8x256xf32> -> vector<8x256xf32>
    %9 = arith.index_cast %c0_i32_4 : i32 to index
    %c0_7 = arith.constant 0 : index
    %c0_8 = arith.constant 0 : index
    %10 = vector.load %arg6[%9, %c0_7, %c0_8] : memref<2x1x256xf32, #tpu.memory_space<vmem>>, vector<1x1x256xf32>
    %11 = vector.shape_cast %10 : vector<1x1x256xf32> to vector<1x256xf32>
    %12 = vector.broadcast %11 : vector<1x256xf32> to vector<8x256xf32>
    %13 = arith.addf %8, %12 : vector<8x256xf32>
    %14 = vector.extract_strided_slice %13 {offsets = [7, 0], sizes = [1, 256], strides = [1, 1]} : vector<8x256xf32> to vector<1x256xf32>
    %15 = arith.index_cast %c0_i32_4 : i32 to index
    %c0_9 = arith.constant 0 : index
    %c0_10 = arith.constant 0 : index
    %16 = vector.load %arg6[%15, %c0_9, %c0_10] : memref<2x1x256xf32, #tpu.memory_space<vmem>>, vector<1x1x256xf32>
    %17 = vector.shape_cast %16 : vector<1x1x256xf32> to vector<1x256xf32>
    %18 = vector.shape_cast %14 : vector<1x256xf32> to vector<1x1x256xf32>
    tpu.vector_store %arg6[%15, %c0_9, %c0_10], %18 {strides = array<i32>} : memref<2x1x256xf32, #tpu.memory_space<vmem>>, vector<1x1x256xf32>,
    %19 = vector.broadcast %4 : vector<8x1xf32> to vector<8x256xf32>
    %20 = arith.mulf %13, %19 : vector<8x256xf32>
    %21 = arith.index_cast %c0_i32_4 : i32 to index
    %c0_11 = arith.constant 0 : index
    %c0_12 = arith.constant 0 : index
    %22 = vector.load %arg5[%21, %c0_11, %c0_12] : memref<2x8x256xf32, #tpu.memory_space<vmem>>, vector<1x8x256xf32>
    %23 = vector.shape_cast %22 : vector<1x8x256xf32> to vector<8x256xf32>
    %24 = vector.shape_cast %20 : vector<8x256xf32> to vector<1x8x256xf32>
    tpu.vector_store %arg5[%21, %c0_11, %c0_12], %24 {strides = array<i32>} : memref<2x8x256xf32, #tpu.memory_space<vmem>>, vector<1x8x256xf32>,
    %c1_i32 = arith.constant 1 : i32
    %25 = arith.index_cast %c1_i32 : i32 to index
    %c0_13 = arith.constant 0 : index
    %c0_14 = arith.constant 0 : index
    %26 = vector.load %arg4[%25, %c0_13, %c0_14] : memref<2x8x256xf32, #tpu.memory_space<vmem>>, vector<1x8x256xf32>
    %27 = vector.shape_cast %26 : vector<1x8x256xf32> to vector<8x256xf32>
    %cst_15 = arith.constant dense<0.000000e+00> : vector<8x256xf32>
    %28 = tpu.matmul %3, %27, %cst_15 {dimension_numbers = #tpu.dot_dimension_numbers<[1], [0], [0], [1], [0, 0, 1, 1], [], []>} : vector<8x8xf32>, vector<8x256xf32>, vector<8x256xf32> -> vector<8x256xf32>
    %29 = arith.index_cast %c1_i32 : i32 to index
    %c0_16 = arith.constant 0 : index
    %c0_17 = arith.constant 0 : index
    %30 = vector.load %arg6[%29, %c0_16, %c0_17] : memref<2x1x256xf32, #tpu.memory_space<vmem>>, vector<1x1x256xf32>
    %31 = vector.shape_cast %30 : vector<1x1x256xf32> to vector<1x256xf32>
    %32 = vector.broadcast %31 : vector<1x256xf32> to vector<8x256xf32>
    %33 = arith.addf %28, %32 : vector<8x256xf32>
    %34 = vector.extract_strided_slice %33 {offsets = [7, 0], sizes = [1, 256], strides = [1, 1]} : vector<8x256xf32> to vector<1x256xf32>
    %35 = arith.index_cast %c1_i32 : i32 to index
    %c0_18 = arith.constant 0 : index
    %c0_19 = arith.constant 0 : index
    %36 = vector.load %arg6[%35, %c0_18, %c0_19] : memref<2x1x256xf32, #tpu.memory_space<vmem>>, vector<1x1x256xf32>
    %37 = vector.shape_cast %36 : vector<1x1x256xf32> to vector<1x256xf32>
    %38 = vector.shape_cast %34 : vector<1x256xf32> to vector<1x1x256xf32>
    tpu.vector_store %arg6[%35, %c0_18, %c0_19], %38 {strides = array<i32>} : memref<2x1x256xf32, #tpu.memory_space<vmem>>, vector<1x1x256xf32>,
    %39 = vector.broadcast %4 : vector<8x1xf32> to vector<8x256xf32>
    %40 = arith.mulf %33, %39 : vector<8x256xf32>
    %41 = arith.index_cast %c1_i32 : i32 to index
    %c0_20 = arith.constant 0 : index
    %c0_21 = arith.constant 0 : index
    %42 = vector.load %arg5[%41, %c0_20, %c0_21] : memref<2x8x256xf32, #tpu.memory_space<vmem>>, vector<1x8x256xf32>
    %43 = vector.shape_cast %42 : vector<1x8x256xf32> to vector<8x256xf32>
    %44 = vector.shape_cast %40 : vector<8x256xf32> to vector<1x8x256xf32>
    tpu.vector_store %arg5[%41, %c0_20, %c0_21], %44 {strides = array<i32>} : memref<2x8x256xf32, #tpu.memory_space<vmem>>, vector<1x8x256xf32>,
    %c2_i32 = arith.constant 2 : i32
    return
  }
  func.func @transform_0(%arg0: i32, %arg1: i32) -> (i32, i32) {
    %c0_i32 = arith.constant 0 : i32
    %c0_i32_0 = arith.constant 0 : i32
    %c0_i32_1 = arith.constant 0 : i32
    return %c0_i32, %c0_i32_0 : i32, i32
  }
  func.func @transform_1(%arg0: i32, %arg1: i32) -> (i32, i32) {
    %c0_i32 = arith.constant 0 : i32
    %c0_i32_0 = arith.constant 0 : i32
    return %arg1, %c0_i32 : i32, i32
  }
  func.func @transform_2(%arg0: i32, %arg1: i32) -> (i32, i32, i32) {
    %c0_i32 = arith.constant 0 : i32
    %c0_i32_0 = arith.constant 0 : i32
    return %arg0, %arg1, %c0_i32 : i32, i32, i32
  }
  func.func @transform_3(%arg0: i32, %arg1: i32) -> (i32, i32, i32) {
    %c0_i32 = arith.constant 0 : i32
    %c0_i32_0 = arith.constant 0 : i32
    return %arg0, %arg1, %c0_i32 : i32, i32, i32
  }
}

</mosaic_0001>

<llo_original>
// kernel: tpu_custom_call.1
$region0: #{tpu_custom_call.1}
  #allocation0 [shape = 'u32[]', space=smem, size = 0x4, offset = 0x4, fixed_abs, tag = 'smem constant byte address 0x4 - core index']
  #allocation1 [shape = 'u32[144,128]{1,0:T(1,128)}', space=vmem, size = 0x12000, scoped, tag = 'internal scratch']
  #allocation2 [shape = 'f32[2,1,256]{2,1,0:T(1,128)}', space=vmem, size = 0x800, scoped, tag = 'scratch operand']
  %s0 = inlined_call_operand.vmem [shape: f32[8,8], index: 0, kind: input, shape index: {}]
  %s1 = inlined_call_operand.vmem [shape: f32[8,1], index: 1, kind: input, shape index: {}]
  %s2 = inlined_call_operand.hbm [shape: f32[2,8,256], index: 2, kind: input, shape index: {}]
  %s3 = inlined_call_operand.hbm [shape: f32[2,8,256], index: 3, kind: output, shape index: {}]
  %s4 = sld [smem:[#allocation0]]
  $region30: #{tpu_custom_call.1} parent=0
    _
  %s6 = ssub.s32 1, %s4
  %s7 = scalar_select 0, %s6, %s4
  $region1: #{tpu_custom_call.1} parent=0
    #allocation3 [shape = 'u8[16384]{0}', space=vmem, size = 0x4000, scoped, tag = 'input window, operand 2, single buffered']
    #allocation4 [shape = 's32[1]{0}', space=sflag, size = 0x4, scoped, tag = 'scoped memory for tpu_custom_call.1']
    #allocation5 [shape = 's32[1]{0}', space=sflag, size = 0x4, scoped, tag = 'scoped memory for tpu_custom_call.1']
    #allocation6 [shape = 'u8[16384]{0}', space=vmem, size = 0x4000, scoped, tag = 'output window, operand 0, single buffered']
    %8 = vsyncpa [#allocation4], 0
    %9 = vsyncpa [#allocation5], 0
    // Predicated region
    $region2: #{tpu_custom_call.1} parent=1 // pred_check
      _
    $region3: #{tpu_custom_call.1} parent=1 // pred_check_branch
      %11 = sbr.rel (0) target = $region5
    $region4: #{tpu_custom_call.1} parent=1 // pred_region
      _
    $region5: #{tpu_custom_call.1} parent=1 // pred_fallthru
      _
    // Predicated region
    $region6: #{tpu_custom_call.1} parent=1 // pred_check
      _
    $region7: #{tpu_custom_call.1} parent=1 // pred_check_branch
      %13 = sbr.rel (0) target = $region9
    $region8: #{tpu_custom_call.1} parent=1 // pred_region
      _
    $region9: #{tpu_custom_call.1} parent=1 // pred_fallthru
      _
    // Predicated region
    $region10: #{tpu_custom_call.1} parent=1 // pred_check
      _
    $region11: #{tpu_custom_call.1} parent=1 // pred_check_branch
      %15 = sbr.rel (0) target = $region13
    $region12: #{tpu_custom_call.1} parent=1 // pred_region
      %s17 = ssub.s32 512, 512
      %18 = vsyncadd [#allocation4], %s17
      %s19 = sshll.u32 [#allocation3], 4
      %s20 = int_to_ptr.vmem [resolvable:$true] %s19
      %25 = dma.hbm_to_vmem [thread:$0]  %s2, 512, %s20, [#allocation4], 256, 256, 16
    $region13: #{tpu_custom_call.1} parent=1 // pred_fallthru
      _
    // Predicated region
    $region14: #{tpu_custom_call.1} parent=1 // pred_check
      _
    $region15: #{tpu_custom_call.1} parent=1 // pred_check_branch
      %27 = sbr.rel (0) target = $region17
    $region16: #{tpu_custom_call.1} parent=1 // pred_region
      %28 = dma.done [#allocation4], 512
    $region17: #{tpu_custom_call.1} parent=1 // pred_fallthru
      _
    %p29 = scmp.eq.s32.totalorder 0, 0
    // Predicated region
    $region18: #{tpu_custom_call.1} parent=1 // pred_check
      %p30 = pneg %p29
    $region19: #{tpu_custom_call.1} parent=1 // pred_check_branch
      %32 = sbr.rel (%p30) target = $region21
    $region20: #{tpu_custom_call.1} parent=1 // pred_region
      %v33 = vlaneseq
      %vm34 = vcmp.ge.s32.totalorder %v33, 0
      %vm35 = vcmp.lt.s32.totalorder %v33, 256
      %vm36 = vmand %vm34, %vm35
      %37 = vst.msk [vmem:[#allocation2] sm:$0x3] %vm36, 0.0
      %38 = vst.msk [vmem:[#allocation2 + $0x2] sm:$0x3] %vm36, 0.0
    $region21: #{tpu_custom_call.1} parent=1 // pred_fallthru
      _
    %v39 = vld [vmem:[%s0] sm:$0xff]
    %v40 = vld [vmem:[%s1] sm:$0xff]
    %v41 = vld [vmem:[#allocation3] sm:$0xff]
    %v42 = vld [vmem:[#allocation3 + $0x8] sm:$0xff]
    %v43 = vld [vmem:[#allocation2] sm:$0x3]
    %v45 = vlaneseq
    %v46 = vshrl.u32 %v45, 7
    %v47 = vsub.s32 0, %v46
    %v48 = vrot.slane %v43, %v47
    %v49 = vlaneseq
    %v50 = vshrl.u32 %v49, 7
    %v51 = vsub.s32 1, %v50
    %v52 = vrot.slane %v43, %v51
    %vm55 = vcmask 64512
    %v57 = vsel %vm55, %v39, 0
    %59 = vmatprep.subr.mxu0 0.0
    %60 = vmatpush1.msra.mxu0 0.0
    %61 = vmatprep.subr.mxu0 0.0
    %62 = vmatpush1.msra.mxu0 0.0
    %63 = vmatprep.subr.mxu0 0.0
    %64 = vmatpush1.msra.mxu0 0.0
    %65 = vmatprep.subr.mxu0 0.0
    %66 = vmatpush1.msra.mxu0 0.0
    %67 = vmatprep.subr.mxu0 0.0
    %68 = vmatpush1.msra.mxu0 0.0
    %69 = vmatprep.subr.mxu0 0.0
    %70 = vmatpush1.msra.mxu0 0.0
    %71 = vmatprep.subr.mxu0 0.0
    %72 = vmatpush1.msra.mxu0 0.0
    %73 = vmatprep.subr.mxu0 0.0
    %74 = vmatpush1.msra.mxu0 0.0
    %75 = vmatprep.subr.mxu0 0.0
    %76 = vmatpush1.msra.mxu0 0.0
    %77 = vmatprep.subr.mxu0 0.0
    %78 = vmatpush1.msra.mxu0 0.0
    %79 = vmatprep.subr.mxu0 0.0
    %80 = vmatpush1.msra.mxu0 0.0
    %81 = vmatprep.subr.mxu0 0.0
    %82 = vmatpush1.msra.mxu0 0.0
    %83 = vmatprep.subr.mxu0 0.0
    %84 = vmatpush1.msra.mxu0 0.0
    %85 = vmatprep.subr.mxu0 0.0
    %86 = vmatpush1.msra.mxu0 0.0
    %87 = vmatprep.subr.mxu0 0.0
    %88 = vmatpush1.msra.mxu0 0.0
    %89 = vmatprep.subr.mxu0 %v42
    %90 = vmatpush1.msra.mxu0 %v41
    %91 = vmatprep.subr.mxu0 0.0
    %92 = vmatpush2.msra.mxu0 0.0
    %93 = vmatprep.subr.mxu0 0.0
    %94 = vmatpush2.msra.mxu0 0.0
    %95 = vmatprep.subr.mxu0 0.0
    %96 = vmatpush2.msra.mxu0 0.0
    %97 = vmatprep.subr.mxu0 0.0
    %98 = vmatpush2.msra.mxu0 0.0
    %99 = vmatprep.subr.mxu0 0.0
    %100 = vmatpush2.msra.mxu0 0.0
    %101 = vmatprep.subr.mxu0 0.0
    %102 = vmatpush2.msra.mxu0 0.0
    %103 = vmatprep.subr.mxu0 0.0
    %104 = vmatpush2.msra.mxu0 0.0
    %105 = vmatprep.subr.mxu0 0.0
    %106 = vmatpush2.msra.mxu0 0.0
    %107 = vmatprep.subr.mxu0 0.0
    %108 = vmatpush2.msra.mxu0 0.0
    %109 = vmatprep.subr.mxu0 0.0
    %110 = vmatpush2.msra.mxu0 0.0
    %111 = vmatprep.subr.mxu0 0.0
    %112 = vmatpush2.msra.mxu0 0.0
    %113 = vmatprep.subr.mxu0 0.0
    %114 = vmatpush2.msra.mxu0 0.0
    %115 = vmatprep.subr.mxu0 0.0
    %116 = vmatpush2.msra.mxu0 0.0
    %117 = vmatprep.subr.mxu0 0.0
    %118 = vmatpush2.msra.mxu0 0.0
    %119 = vmatprep.subr.mxu0 0.0
    %120 = vmatpush2.msra.mxu0 0.0
    %121 = vmatprep.subr.mxu0 0.0
    %122 = vmatpush2.msra.mxu0 0.0
    %123 = vmatprep.mubr.f32.mxu0 0.0
    %124 = vmatmul.mubr.f32.gmra.mxu0 %v57
    %v125 = vpop.f32.mrf.mxu0
    %v126 = vadd.f32 %v48, %v125
    %v127 = vpop.f32.mrf.mxu0
    %v128 = vadd.f32 %v52, %v127
    %129 = vdwg.mxu0
    %v132 = vcombine.high %v126, %v128
    %v134 = vunpack.c.l.s4 1966171168
    %v135 = vunpack.c.0.s8 %v134
    %v136 = vlaneseq
    %v137 = vshrl.u32 %v136, 7
    %v138 = vsub.s32 %v135, %v137
    %v139 = vrot.slane %v132, %v138
    %v140 = vcombine.high %v139, %v139
    %v142 = vunpack.c.l.s4 1966171168
    %v143 = vunpack.c.0.s8 %v142
    %v144 = vlaneseq
    %v145 = vshrl.u32 %v144, 7
    %v146 = vsub.s32 %v143, %v145
    %v147 = vrot.slane %v140, %v146
    %v148 = vcombine.high %v147, %v147
    %v150 = vlaneseq
    %vm151 = vcmp.ge.s32.totalorder %v150, 0
    %vm152 = vcmp.lt.s32.totalorder %v150, 256
    %vm153 = vmand %vm151, %vm152
    %154 = vst.msk [vmem:[#allocation2] sm:$0x3] %vm153, %v148
    %156 = vset.pattern.permute.xlu0 0
    %157 = vperm.xlu0 %156, %v40
    %v158 = vpop.permute.xlu0 %157
    %v160 = vmul.f32 %v126, %v158
    %v161 = vmul.f32 %v128, %v158
    %162 = vst [vmem:[#allocation6] sm:$0xff] %v160
    %163 = vst [vmem:[#allocation6 + $0x8] sm:$0xff] %v161
    %s164 = scalar_lea.vmem [#allocation3], 16
    %v165 = vld [vmem:[%s164] sm:$0xff]
    %v166 = vld [vmem:[%s164 + $0x8] sm:$0xff]
    %s167 = scalar_lea.vmem [#allocation2], 2
    %v168 = vld [vmem:[%s167] sm:$0x3]
    %v170 = vlaneseq
    %v171 = vshrl.u32 %v170, 7
    %v172 = vsub.s32 0, %v171
    %v173 = vrot.slane %v168, %v172
    %v174 = vlaneseq
    %v175 = vshrl.u32 %v174, 7
    %v176 = vsub.s32 1, %v175
    %v177 = vrot.slane %v168, %v176
    %180 = vmatprep.subr.mxu0 0.0
    %181 = vmatpush1.msra.mxu0 0.0
    %182 = vmatprep.subr.mxu0 0.0
    %183 = vmatpush1.msra.mxu0 0.0
    %184 = vmatprep.subr.mxu0 0.0
    %185 = vmatpush1.msra.mxu0 0.0
    %186 = vmatprep.subr.mxu0 0.0
    %187 = vmatpush1.msra.mxu0 0.0
    %188 = vmatprep.subr.mxu0 0.0
    %189 = vmatpush1.msra.mxu0 0.0
    %190 = vmatprep.subr.mxu0 0.0
    %191 = vmatpush1.msra.mxu0 0.0
    %192 = vmatprep.subr.mxu0 0.0
    %193 = vmatpush1.msra.mxu0 0.0
    %194 = vmatprep.subr.mxu0 0.0
    %195 = vmatpush1.msra.mxu0 0.0
    %196 = vmatprep.subr.mxu0 0.0
    %197 = vmatpush1.msra.mxu0 0.0
    %198 = vmatprep.subr.mxu0 0.0
    %199 = vmatpush1.msra.mxu0 0.0
    %200 = vmatprep.subr.mxu0 0.0
    %201 = vmatpush1.msra.mxu0 0.0
    %202 = vmatprep.subr.mxu0 0.0
    %203 = vmatpush1.msra.mxu0 0.0
    %204 = vmatprep.subr.mxu0 0.0
    %205 = vmatpush1.msra.mxu0 0.0
    %206 = vmatprep.subr.mxu0 0.0
    %207 = vmatpush1.msra.mxu0 0.0
    %208 = vmatprep.subr.mxu0 0.0
    %209 = vmatpush1.msra.mxu0 0.0
    %210 = vmatprep.subr.mxu0 %v166
    %211 = vmatpush1.msra.mxu0 %v165
    %212 = vmatprep.subr.mxu0 0.0
    %213 = vmatpush2.msra.mxu0 0.0
    %214 = vmatprep.subr.mxu0 0.0
    %215 = vmatpush2.msra.mxu0 0.0
    %216 = vmatprep.subr.mxu0 0.0
    %217 = vmatpush2.msra.mxu0 0.0
    %218 = vmatprep.subr.mxu0 0.0
    %219 = vmatpush2.msra.mxu0 0.0
    %220 = vmatprep.subr.mxu0 0.0
    %221 = vmatpush2.msra.mxu0 0.0
    %222 = vmatprep.subr.mxu0 0.0
    %223 = vmatpush2.msra.mxu0 0.0
    %224 = vmatprep.subr.mxu0 0.0
    %225 = vmatpush2.msra.mxu0 0.0
    %226 = vmatprep.subr.mxu0 0.0
    %227 = vmatpush2.msra.mxu0 0.0
    %228 = vmatprep.subr.mxu0 0.0
    %229 = vmatpush2.msra.mxu0 0.0
    %230 = vmatprep.subr.mxu0 0.0
    %231 = vmatpush2.msra.mxu0 0.0
    %232 = vmatprep.subr.mxu0 0.0
    %233 = vmatpush2.msra.mxu0 0.0
    %234 = vmatprep.subr.mxu0 0.0
    %235 = vmatpush2.msra.mxu0 0.0
    %236 = vmatprep.subr.mxu0 0.0
    %237 = vmatpush2.msra.mxu0 0.0
    %238 = vmatprep.subr.mxu0 0.0
    %239 = vmatpush2.msra.mxu0 0.0
    %240 = vmatprep.subr.mxu0 0.0
    %241 = vmatpush2.msra.mxu0 0.0
    %242 = vmatprep.subr.mxu0 0.0
    %243 = vmatpush2.msra.mxu0 0.0
    %244 = vmatprep.mubr.f32.mxu0 0.0
    %245 = vmatmul.mubr.f32.gmra.mxu0 %v57
    %v246 = vpop.f32.mrf.mxu0
    %v247 = vadd.f32 %v173, %v246
    %v248 = vpop.f32.mrf.mxu0
    %v249 = vadd.f32 %v177, %v248
    %250 = vdwg.mxu0
    %v253 = vcombine.high %v247, %v249
    %v255 = vunpack.c.l.s4 1966171168
    %v256 = vunpack.c.0.s8 %v255
    %v257 = vlaneseq
    %v258 = vshrl.u32 %v257, 7
    %v259 = vsub.s32 %v256, %v258
    %v260 = vrot.slane %v253, %v259
    %v261 = vcombine.high %v260, %v260
    %v263 = vunpack.c.l.s4 1966171168
    %v264 = vunpack.c.0.s8 %v263
    %v265 = vlaneseq
    %v266 = vshrl.u32 %v265, 7
    %v267 = vsub.s32 %v264, %v266
    %v268 = vrot.slane %v261, %v267
    %v269 = vcombine.high %v268, %v268
    %271 = vst.msk [vmem:[%s167] sm:$0x3] %vm153, %v269
    %v272 = vmul.f32 %v247, %v158
    %v273 = vmul.f32 %v249, %v158
    %s274 = scalar_lea.vmem [#allocation6], 16
    %275 = vst [vmem:[%s274] sm:$0xff] %v272
    %276 = vst [vmem:[%s274 + $0x8] sm:$0xff] %v273
    // Predicated region
    $region22: #{tpu_custom_call.1} parent=1 // pred_check
      _
    $region23: #{tpu_custom_call.1} parent=1 // pred_check_branch
      %278 = sbr.rel (0) target = $region25
    $region24: #{tpu_custom_call.1} parent=1 // pred_region
      %s280 = ssub.s32 512, 512
      %281 = vsyncadd [#allocation5], %s280
      %s282 = sshll.u32 [#allocation6], 4
      %s283 = int_to_ptr.vmem [resolvable:$true] %s282
      %288 = dma.vmem_to_hbm [thread:$0]  %s283, 512, %s3, [#allocation5], 256, 256, 16
    $region25: #{tpu_custom_call.1} parent=1 // pred_fallthru
      _
    // Predicated region
    $region26: #{tpu_custom_call.1} parent=1 // pred_check
      _
    $region27: #{tpu_custom_call.1} parent=1 // pred_check_branch
      %290 = sbr.rel (0) target = $region29
    $region28: #{tpu_custom_call.1} parent=1 // pred_region
      %291 = dma.done [#allocation5], 512
    $region29: #{tpu_custom_call.1} parent=1 // pred_fallthru
      _
    %292 = vsyncpa [#allocation4], 1
    %293 = vsyncpa [#allocation5], 1

</llo_original>
